<compile_context>
chip_gen: v6e
topology: v6e:2x2x1
jax: 0.10.0
libtpu: 0.0.40
codegen_flags: <defaults>
</compile_context>

<pallas_src>
import numpy as np
import jax
import jax.numpy as jnp
from jax.experimental import pallas as pl
from jax.experimental.pallas import tpu as pltpu


def _round_up(v, m):
    return ((v + m - 1) // m) * m


# ----------------------------------------------------------------------------
# Synthetic hierarchy construction (mirrors HierarchicalLLLoss.__init__ logic,
# but with an in-script toy tree instead of an nltk Tree / dataset labels).
# Returns both the original module parameters (for the reference) and the
# reformulated static tables used by the kernel.
# ----------------------------------------------------------------------------
def _build_synthetic_hierarchy():
    # Tree node = [label, *children]; a leaf is just a str label.
    tree = ["root",
            ["A", "a0", "a1"],
            ["B", "b0", "b1", ["B1", "b2", "b3"]],
            ["Cgrp", "c0", "c1"]]

    def treepositions(node):
        pos = [()]
        if isinstance(node, list):
            for i, ch in enumerate(node[1:]):
                pos.extend((i,) + p for p in treepositions(ch))
        return pos

    def subtree(node, position):
        for i in position:
            node = node[1 + i]
        return node

    def leaf_positions(node):
        if not isinstance(node, list):
            return [()]
        out = []
        for i, ch in enumerate(node[1:]):
            out.extend((i,) + p for p in leaf_positions(ch))
        return out

    all_pos = treepositions(tree)
    leaf_label_to_pos = {subtree(tree, p): p for p in all_pos
                         if not isinstance(subtree(tree, p), list)}
    classes = sorted(leaf_label_to_pos.keys())          # alphabetical leaf order
    positions_leaves = [leaf_label_to_pos[c] for c in classes]
    positions_edges = all_pos[1:]
    C = len(positions_leaves)
    K = len(positions_edges)
    index_map_leaves = {positions_leaves[i]: i for i in range(C)}
    index_map_edges = {positions_edges[i]: i for i in range(K)}
    edges_from_leaf = [[index_map_edges[p[:i]] for i in range(len(p), 0, -1)]
                       for p in positions_leaves]
    E = max(len(p) for p in edges_from_leaf)             # num_edges (max depth)

    leaf_indices = [[index_map_leaves[pos + lp]
                     for lp in leaf_positions(subtree(tree, pos))]
                    for pos in positions_edges]

    # Deterministic edge weight: exp(-0.5 * (depth - 1))
    def edge_weight(position):
        return float(np.exp(-0.5 * (len(position) - 1)))

    # --- original module parameters (used by the pure-JAX reference) --------
    onehot_num = np.zeros((C, C, E), np.float32)
    onehot_den = np.zeros((C, C, E), np.float32)
    weights = np.zeros((C, E), np.float32)
    for i in range(C):
        for j, k in enumerate(edges_from_leaf[i]):
            onehot_num[i, leaf_indices[k], j] = 1.0
            weights[i, j] = edge_weight(positions_edges[k])
        for j, k in enumerate(edges_from_leaf[i][1:]):
            onehot_den[i, leaf_indices[k], j] = 1.0
        onehot_den[i, :, j + 1] = 1.0   # root denominator (matches torch code)

    # --- reformulated static tables (used by the Pallas kernel) -------------
    ROOT = K        # column K    : all-ones  -> root denominator = sum(x)
    ZERO = K + 1    # column K+1  : all-zeros -> sentinel for padded edge slots
    A = np.zeros((C, K + 2), np.float32)
    for k in range(K):
        A[leaf_indices[k], k] = 1.0
    A[:, ROOT] = 1.0

    chain_num = np.full((C, E), ZERO, np.int32)
    chain_den = np.full((C, E), ZERO, np.int32)
    for i in range(C):
        chain = edges_from_leaf[i]
        d = len(chain)
        for j in range(d):
            chain_num[i, j] = chain[j]
            chain_den[i, j] = chain[j + 1] if j + 1 < d else ROOT

    return dict(onehot_num=onehot_num, onehot_den=onehot_den, weights=weights,
                A=A, chain_num=chain_num, chain_den=chain_den,
                C=C, E=E, K=K)


# ----------------------------------------------------------------------------
# Pallas kernel: one grid step per TM-sample batch tile (samples on lanes).
# ----------------------------------------------------------------------------
def _hxe_kernel(x_ref,      # (CP, TM)  transposed probabilities
                a_ref,      # (KP, CP)  static leaf->edge indicator (transposed)
                idxn_ref,   # (E,  TM)  numerator edge index per (slot, sample)
                idxd_ref,   # (E,  TM)  denominator edge index per (slot, sample)
                w_ref,      # (E,  TM)  per-sample edge weights
                out_ref):   # (1,  TM)  per-sample loss (lane-dense)
    # All edge probabilities for every sample of this tile: ONE MXU matmul.
    ep = jnp.dot(a_ref[...], x_ref[...],
                 preferred_element_type=jnp.float32)          # (KP, TM)
    # Edge-row index for the iota==index gathers below.
    row = jax.lax.broadcasted_iota(jnp.int32, ep.shape, 0)    # (KP, TM)

    loss = jnp.zeros((1, ep.shape[1]), jnp.float32)
    n_slots = idxn_ref.shape[0]        # == num_edges (tree depth), tiny & static
    for j in range(n_slots):
        # Gather num_j[b] = ep[idx_num[j,b], b]  (and same for den) via a
        # per-lane select + sublane reduce (XLU) -- no per-sample DMA.
        sel_n = (row == idxn_ref[j:j + 1, :]).astype(jnp.float32)
        sel_d = (row == idxd_ref[j:j + 1, :]).astype(jnp.float32)
        num = jnp.sum(ep * sel_n, axis=0, keepdims=True)      # (1, TM)
        den = jnp.sum(ep * sel_d, axis=0, keepdims=True)      # (1, TM)

        # torch: num[idx] = -log(num[idx] / den[idx]) where idx = (num != 0).
        mask = num != 0.0
        term = jnp.where(
            mask,
            jnp.log(jnp.where(mask, den, 1.0))
            - jnp.log(jnp.where(mask, num, 1.0)),
            0.0)
        loss = loss + w_ref[j:j + 1, :] * term

    out_ref[...] = loss   # lane-dense per-sample losses


def hierarchical_ll_loss(inputs, target, A, chain_num, chain_den, weights):
    """inputs: (B, C) f32 probabilities; target: (B,) int. Returns scalar f32."""
    B, C = inputs.shape
    Ctab, K2 = A.shape
    E = chain_num.shape[1]
    assert Ctab == C

    CP = _round_up(C, 128)                     # contraction dim (lane aligned)
    KP = _round_up(K2, 8)                      # edge rows (sublane aligned)
    TM = 128 if B > 128 else _round_up(B, 8)   # samples per grid step (lanes)
    BP = _round_up(B, TM)
    G = BP // TM
    zero_col = K2 - 1                          # all-zero sentinel column

    # Static indicator, transposed: edges on sublanes, classes on lanes.
    a_t = jnp.zeros((KP, CP), jnp.float32).at[:K2, :C].set(jnp.asarray(A).T)

    # Transposed probabilities: classes on sublanes, samples on lanes.
    x_t = jnp.zeros((CP, BP), jnp.float32).at[:C, :B].set(
        inputs.astype(jnp.float32).T)

    # Tiny (B, E) target-indexed gathers done in plain XLA (mirrors
    # self.weights[target] etc. in the torch forward), then transposed so the
    # sample axis is lane-dense. Padded batch columns -> sentinel / weight 0.
    tgt = target.astype(jnp.int32)
    idxn = jnp.full((E, BP), zero_col, jnp.int32).at[:, :B].set(
        jnp.asarray(chain_num)[tgt].T)
    idxd = jnp.full((E, BP), zero_col, jnp.int32).at[:, :B].set(
        jnp.asarray(chain_den)[tgt].T)
    w_t = jnp.zeros((E, BP), jnp.float32).at[:, :B].set(
        jnp.asarray(weights)[tgt].T)

    per_sample = pl.pallas_call(
        _hxe_kernel,
        out_shape=jax.ShapeDtypeStruct((1, BP), jnp.float32),
        grid_spec=pltpu.PrefetchScalarGridSpec(
            num_scalar_prefetch=0,
            grid=(G,),
            in_specs=[
                pl.BlockSpec((CP, TM), lambda i: (0, i)),   # x^T tile
                pl.BlockSpec((KP, CP), lambda i: (0, 0)),   # A^T, resident
                pl.BlockSpec((E, TM), lambda i: (0, i)),    # num indices
                pl.BlockSpec((E, TM), lambda i: (0, i)),    # den indices
                pl.BlockSpec((E, TM), lambda i: (0, i)),    # weights
            ],
            out_specs=pl.BlockSpec((1, TM), lambda i: (0, i)),
        ),
        compiler_params=pltpu.CompilerParams(
            dimension_semantics=("parallel",)),
    )(x_t, a_t, idxn, idxd, w_t)

    # Batch mean in the wrapper (no carried accumulator in the kernel).
    return jnp.mean(per_sample[0, :B])


# ----------------------------------------------------------------------------
# Pure-JAX reference (mirrors the torch forward exactly).
# ----------------------------------------------------------------------------
def reference_loss(inputs, target, onehot_num, onehot_den, weights):
    num = jnp.einsum("bc,bce->be", inputs, onehot_num[target])
    den = jnp.einsum("bc,bce->be", inputs, onehot_den[target])
    mask = num != 0.0
    term = jnp.where(
        mask,
        -jnp.log(jnp.where(mask, num, 1.0) / jnp.where(mask, den, 1.0)),
        0.0,
    )
    per_sample = jnp.sum(jnp.flip(weights[target] * term, axis=1), axis=1)
    return jnp.mean(per_sample)


if __name__ == "__main__":
    tabs = _build_synthetic_hierarchy()
    C, E = tabs["C"], tabs["E"]
    B = 8

    key = jax.random.PRNGKey(0)
    k_logits, k_tgt = jax.random.split(key)
    logits = jax.random.normal(k_logits, (B, C), dtype=jnp.float32)
    inputs = jax.nn.softmax(logits, axis=-1)             # flat probability vectors
    target = jax.random.randint(k_tgt, (B,), 0, C, dtype=jnp.int32)

    loss = hierarchical_ll_loss(inputs, target,
                                tabs["A"], tabs["chain_num"],
                                tabs["chain_den"], tabs["weights"])
    loss = jax.block_until_ready(loss)

    ref = jax.block_until_ready(reference_loss(
        inputs, target,
        jnp.asarray(tabs["onehot_num"]),
        jnp.asarray(tabs["onehot_den"]),
        jnp.asarray(tabs["weights"])))
    np.testing.assert_allclose(float(loss), float(ref), rtol=1e-4, atol=1e-5)
    print("KERNEL_OK")
</pallas_src>

<mosaic_0001>
module attributes {stable_mosaic.version = 11 : i64} {
  func.func @_hxe_kernel(%arg0: i32, %arg1: memref<128x8xf32, #tpu.memory_space<vmem>>, %arg2: memref<16x128xf32, #tpu.memory_space<vmem>>, %arg3: memref<3x8xi32, #tpu.memory_space<vmem>>, %arg4: memref<3x8xi32, #tpu.memory_space<vmem>>, %arg5: memref<3x8xf32, #tpu.memory_space<vmem>>, %arg6: memref<1x8xf32, #tpu.memory_space<vmem>>) attributes {dimension_semantics = [#tpu.dimension_semantics<parallel>], iteration_bounds = array<i64: 1>, scalar_prefetch = 0 : i64, scratch_operands = 0 : i64, tpu.core_type = #tpu.core_type<tc>, window_params = [{transform_indices = @transform_0, window_bounds = array<i64: 128, 8>}, {pipeline_mode = #tpu.pipeline_mode<synchronous>, transform_indices = @transform_1, window_bounds = array<i64: 16, 128>}, {transform_indices = @transform_2, window_bounds = array<i64: 3, 8>}, {transform_indices = @transform_3, window_bounds = array<i64: 3, 8>}, {transform_indices = @transform_4, window_bounds = array<i64: 3, 8>}, {transform_indices = @transform_5, window_bounds = array<i64: 1, 8>}]} {
    %c0 = arith.constant 0 : index
    %c0_0 = arith.constant 0 : index
    %0 = vector.load %arg2[%c0, %c0_0] : memref<16x128xf32, #tpu.memory_space<vmem>>, vector<16x128xf32>
    %c0_1 = arith.constant 0 : index
    %c0_2 = arith.constant 0 : index
    %1 = vector.load %arg1[%c0_1, %c0_2] : memref<128x8xf32, #tpu.memory_space<vmem>>, vector<128x8xf32>
    %cst = arith.constant dense<0.000000e+00> : vector<16x8xf32>
    %2 = tpu.matmul %0, %1, %cst {dimension_numbers = #tpu.dot_dimension_numbers<[1], [0], [0], [1], [0, 0, 1, 1], [], []>} : vector<16x128xf32>, vector<128x8xf32>, vector<16x8xf32> -> vector<16x8xf32>
    %3 = tpu.iota {dimensions = array<i32: 0>} : vector<16x8xi32>
    %cst_3 = arith.constant 0.000000e+00 : f32
    %4 = vector.broadcast %cst_3 : f32 to vector<1x8xf32>
    %c0_4 = arith.constant 0 : index
    %c0_5 = arith.constant 0 : index
    %5 = vector.load %arg3[%c0_4, %c0_5] : memref<3x8xi32, #tpu.memory_space<vmem>>, vector<1x8xi32>
    %6 = vector.broadcast %5 : vector<1x8xi32> to vector<16x8xi32>
    %7 = arith.cmpi eq, %3, %6 : vector<16x8xi32>
    %8 = arith.extui %7 : vector<16x8xi1> to vector<16x8xi32>
    %9 = arith.sitofp %8 : vector<16x8xi32> to vector<16x8xf32>
    %c0_6 = arith.constant 0 : index
    %c0_7 = arith.constant 0 : index
    %10 = vector.load %arg4[%c0_6, %c0_7] : memref<3x8xi32, #tpu.memory_space<vmem>>, vector<1x8xi32>
    %11 = vector.broadcast %10 : vector<1x8xi32> to vector<16x8xi32>
    %12 = arith.cmpi eq, %3, %11 : vector<16x8xi32>
    %13 = arith.extui %12 : vector<16x8xi1> to vector<16x8xi32>
    %14 = arith.sitofp %13 : vector<16x8xi32> to vector<16x8xf32>
    %15 = arith.mulf %2, %9 : vector<16x8xf32>
    %cst_8 = arith.constant dense<0.000000e+00> : vector<8xf32>
    %16 = vector.multi_reduction <add>, %15, %cst_8 [0] : vector<16x8xf32> to vector<8xf32>
    %17 = vector.shape_cast %16 : vector<8xf32> to vector<1x8xf32>
    %18 = arith.mulf %2, %14 : vector<16x8xf32>
    %cst_9 = arith.constant dense<0.000000e+00> : vector<8xf32>
    %19 = vector.multi_reduction <add>, %18, %cst_9 [0] : vector<16x8xf32> to vector<8xf32>
    %20 = vector.shape_cast %19 : vector<8xf32> to vector<1x8xf32>
    %cst_10 = arith.constant 0.000000e+00 : f32
    %21 = vector.broadcast %cst_10 : f32 to vector<1x8xf32>
    %22 = arith.cmpf one, %17, %21 : vector<1x8xf32>
    %cst_11 = arith.constant 1.000000e+00 : f32
    %23 = vector.broadcast %cst_11 : f32 to vector<1x8xf32>
    %24 = arith.select %22, %20, %23 : vector<1x8xi1>, vector<1x8xf32>
    %25 = math.log %24 : vector<1x8xf32>
    %cst_12 = arith.constant 1.000000e+00 : f32
    %26 = vector.broadcast %cst_12 : f32 to vector<1x8xf32>
    %27 = arith.select %22, %17, %26 : vector<1x8xi1>, vector<1x8xf32>
    %28 = math.log %27 : vector<1x8xf32>
    %29 = arith.subf %25, %28 : vector<1x8xf32>
    %cst_13 = arith.constant 0.000000e+00 : f32
    %30 = vector.broadcast %cst_13 : f32 to vector<1x8xf32>
    %31 = arith.select %22, %29, %30 : vector<1x8xi1>, vector<1x8xf32>
    %c0_14 = arith.constant 0 : index
    %c0_15 = arith.constant 0 : index
    %32 = vector.load %arg5[%c0_14, %c0_15] : memref<3x8xf32, #tpu.memory_space<vmem>>, vector<1x8xf32>
    %33 = arith.mulf %32, %31 : vector<1x8xf32>
    %34 = arith.addf %4, %33 : vector<1x8xf32>
    %c1 = arith.constant 1 : index
    %c0_16 = arith.constant 0 : index
    %35 = vector.load %arg3[%c1, %c0_16] : memref<3x8xi32, #tpu.memory_space<vmem>>, vector<1x8xi32>
    %36 = vector.broadcast %35 : vector<1x8xi32> to vector<16x8xi32>
    %37 = arith.cmpi eq, %3, %36 : vector<16x8xi32>
    %38 = arith.extui %37 : vector<16x8xi1> to vector<16x8xi32>
    %39 = arith.sitofp %38 : vector<16x8xi32> to vector<16x8xf32>
    %c1_17 = arith.constant 1 : index
    %c0_18 = arith.constant 0 : index
    %40 = vector.load %arg4[%c1_17, %c0_18] : memref<3x8xi32, #tpu.memory_space<vmem>>, vector<1x8xi32>
    %41 = vector.broadcast %40 : vector<1x8xi32> to vector<16x8xi32>
    %42 = arith.cmpi eq, %3, %41 : vector<16x8xi32>
    %43 = arith.extui %42 : vector<16x8xi1> to vector<16x8xi32>
    %44 = arith.sitofp %43 : vector<16x8xi32> to vector<16x8xf32>
    %45 = arith.mulf %2, %39 : vector<16x8xf32>
    %cst_19 = arith.constant dense<0.000000e+00> : vector<8xf32>
    %46 = vector.multi_reduction <add>, %45, %cst_19 [0] : vector<16x8xf32> to vector<8xf32>
    %47 = vector.shape_cast %46 : vector<8xf32> to vector<1x8xf32>
    %48 = arith.mulf %2, %44 : vector<16x8xf32>
    %cst_20 = arith.constant dense<0.000000e+00> : vector<8xf32>
    %49 = vector.multi_reduction <add>, %48, %cst_20 [0] : vector<16x8xf32> to vector<8xf32>
    %50 = vector.shape_cast %49 : vector<8xf32> to vector<1x8xf32>
    %cst_21 = arith.constant 0.000000e+00 : f32
    %51 = vector.broadcast %cst_21 : f32 to vector<1x8xf32>
    %52 = arith.cmpf one, %47, %51 : vector<1x8xf32>
    %cst_22 = arith.constant 1.000000e+00 : f32
    %53 = vector.broadcast %cst_22 : f32 to vector<1x8xf32>
    %54 = arith.select %52, %50, %53 : vector<1x8xi1>, vector<1x8xf32>
    %55 = math.log %54 : vector<1x8xf32>
    %cst_23 = arith.constant 1.000000e+00 : f32
    %56 = vector.broadcast %cst_23 : f32 to vector<1x8xf32>
    %57 = arith.select %52, %47, %56 : vector<1x8xi1>, vector<1x8xf32>
    %58 = math.log %57 : vector<1x8xf32>
    %59 = arith.subf %55, %58 : vector<1x8xf32>
    %cst_24 = arith.constant 0.000000e+00 : f32
    %60 = vector.broadcast %cst_24 : f32 to vector<1x8xf32>
    %61 = arith.select %52, %59, %60 : vector<1x8xi1>, vector<1x8xf32>
    %c1_25 = arith.constant 1 : index
    %c0_26 = arith.constant 0 : index
    %62 = vector.load %arg5[%c1_25, %c0_26] : memref<3x8xf32, #tpu.memory_space<vmem>>, vector<1x8xf32>
    %63 = arith.mulf %62, %61 : vector<1x8xf32>
    %64 = arith.addf %34, %63 : vector<1x8xf32>
    %c2 = arith.constant 2 : index
    %c0_27 = arith.constant 0 : index
    %65 = vector.load %arg3[%c2, %c0_27] : memref<3x8xi32, #tpu.memory_space<vmem>>, vector<1x8xi32>
    %66 = vector.broadcast %65 : vector<1x8xi32> to vector<16x8xi32>
    %67 = arith.cmpi eq, %3, %66 : vector<16x8xi32>
    %68 = arith.extui %67 : vector<16x8xi1> to vector<16x8xi32>
    %69 = arith.sitofp %68 : vector<16x8xi32> to vector<16x8xf32>
    %c2_28 = arith.constant 2 : index
    %c0_29 = arith.constant 0 : index
    %70 = vector.load %arg4[%c2_28, %c0_29] : memref<3x8xi32, #tpu.memory_space<vmem>>, vector<1x8xi32>
    %71 = vector.broadcast %70 : vector<1x8xi32> to vector<16x8xi32>
    %72 = arith.cmpi eq, %3, %71 : vector<16x8xi32>
    %73 = arith.extui %72 : vector<16x8xi1> to vector<16x8xi32>
    %74 = arith.sitofp %73 : vector<16x8xi32> to vector<16x8xf32>
    %75 = arith.mulf %2, %69 : vector<16x8xf32>
    %cst_30 = arith.constant dense<0.000000e+00> : vector<8xf32>
    %76 = vector.multi_reduction <add>, %75, %cst_30 [0] : vector<16x8xf32> to vector<8xf32>
    %77 = vector.shape_cast %76 : vector<8xf32> to vector<1x8xf32>
    %78 = arith.mulf %2, %74 : vector<16x8xf32>
    %cst_31 = arith.constant dense<0.000000e+00> : vector<8xf32>
    %79 = vector.multi_reduction <add>, %78, %cst_31 [0] : vector<16x8xf32> to vector<8xf32>
    %80 = vector.shape_cast %79 : vector<8xf32> to vector<1x8xf32>
    %cst_32 = arith.constant 0.000000e+00 : f32
    %81 = vector.broadcast %cst_32 : f32 to vector<1x8xf32>
    %82 = arith.cmpf one, %77, %81 : vector<1x8xf32>
    %cst_33 = arith.constant 1.000000e+00 : f32
    %83 = vector.broadcast %cst_33 : f32 to vector<1x8xf32>
    %84 = arith.select %82, %80, %83 : vector<1x8xi1>, vector<1x8xf32>
    %85 = math.log %84 : vector<1x8xf32>
    %cst_34 = arith.constant 1.000000e+00 : f32
    %86 = vector.broadcast %cst_34 : f32 to vector<1x8xf32>
    %87 = arith.select %82, %77, %86 : vector<1x8xi1>, vector<1x8xf32>
    %88 = math.log %87 : vector<1x8xf32>
    %89 = arith.subf %85, %88 : vector<1x8xf32>
    %cst_35 = arith.constant 0.000000e+00 : f32
    %90 = vector.broadcast %cst_35 : f32 to vector<1x8xf32>
    %91 = arith.select %82, %89, %90 : vector<1x8xi1>, vector<1x8xf32>
    %c2_36 = arith.constant 2 : index
    %c0_37 = arith.constant 0 : index
    %92 = vector.load %arg5[%c2_36, %c0_37] : memref<3x8xf32, #tpu.memory_space<vmem>>, vector<1x8xf32>
    %93 = arith.mulf %92, %91 : vector<1x8xf32>
    %94 = arith.addf %64, %93 : vector<1x8xf32>
    %c0_38 = arith.constant 0 : index
    %c0_39 = arith.constant 0 : index
    %95 = vector.load %arg6[%c0_38, %c0_39] : memref<1x8xf32, #tpu.memory_space<vmem>>, vector<1x8xf32>
    tpu.vector_store %arg6[%c0_38, %c0_39], %94 {strides = array<i32>} : memref<1x8xf32, #tpu.memory_space<vmem>>, vector<1x8xf32>,
    return
  }
  func.func @transform_0(%arg0: i32) -> (i32, i32) {
    %c0_i32 = arith.constant 0 : i32
    %c0_i32_0 = arith.constant 0 : i32
    return %c0_i32, %arg0 : i32, i32
  }
  func.func @transform_1(%arg0: i32) -> (i32, i32) {
    %c0_i32 = arith.constant 0 : i32
    %c0_i32_0 = arith.constant 0 : i32
    %c0_i32_1 = arith.constant 0 : i32
    return %c0_i32, %c0_i32_0 : i32, i32
  }
  func.func @transform_2(%arg0: i32) -> (i32, i32) {
    %c0_i32 = arith.constant 0 : i32
    %c0_i32_0 = arith.constant 0 : i32
    return %c0_i32, %arg0 : i32, i32
  }
  func.func @transform_3(%arg0: i32) -> (i32, i32) {
    %c0_i32 = arith.constant 0 : i32
    %c0_i32_0 = arith.constant 0 : i32
    return %c0_i32, %arg0 : i32, i32
  }
  func.func @transform_4(%arg0: i32) -> (i32, i32) {
    %c0_i32 = arith.constant 0 : i32
    %c0_i32_0 = arith.constant 0 : i32
    return %c0_i32, %arg0 : i32, i32
  }
  func.func @transform_5(%arg0: i32) -> (i32, i32) {
    %c0_i32 = arith.constant 0 : i32
    %c0_i32_0 = arith.constant 0 : i32
    return %c0_i32, %arg0 : i32, i32
  }
}

</mosaic_0001>

<llo_original>
// kernel: tpu_custom_call.1
$region0: #{tpu_custom_call.1}
  #allocation0 [shape = 'u32[]', space=smem, size = 0x4, offset = 0x4, fixed_abs, tag = 'smem constant byte address 0x4 - core index']
  #allocation1 [shape = 'u32[144,128]{1,0:T(1,128)}', space=vmem, size = 0x12000, scoped, tag = 'internal scratch']
  %s0 = inlined_call_operand.vmem [shape: f32[128,8], index: 0, kind: input, shape index: {}]
  %s1 = inlined_call_operand.vmem [shape: f32[16,128], index: 1, kind: input, shape index: {}]
  %s2 = inlined_call_operand.vmem [shape: s32[3,8], index: 2, kind: input, shape index: {}]
  %s3 = inlined_call_operand.vmem [shape: s32[3,8], index: 3, kind: input, shape index: {}]
  %s4 = inlined_call_operand.vmem [shape: f32[3,8], index: 4, kind: input, shape index: {}]
  %s5 = inlined_call_operand.hbm [shape: f32[1,8], index: 5, kind: output, shape index: {}]
  %s6 = sld [smem:[#allocation0]]
  $region30: #{tpu_custom_call.1} parent=0
    _
  %s8 = ssub.s32 1, %s6
  %s9 = scalar_select 0, %s8, %s6
  $region1: #{tpu_custom_call.1} parent=0
    #allocation2 [shape = 'u8[512]{0}', space=vmem, size = 0x400, scoped, tag = 'output window, operand 0, single buffered']
    #allocation3 [shape = 's32[1]{0}', space=sflag, size = 0x4, scoped, tag = 'scoped memory for tpu_custom_call.1']
    %10 = vsyncpa [#allocation3], 0
    // Predicated region
    $region2: #{tpu_custom_call.1} parent=1 // pred_check
      _
    $region3: #{tpu_custom_call.1} parent=1 // pred_check_branch
      %12 = sbr.rel (0) target = $region5
    $region4: #{tpu_custom_call.1} parent=1 // pred_region
      _
    $region5: #{tpu_custom_call.1} parent=1 // pred_fallthru
      _
    // Predicated region
    $region6: #{tpu_custom_call.1} parent=1 // pred_check
      _
    $region7: #{tpu_custom_call.1} parent=1 // pred_check_branch
      %14 = sbr.rel (0) target = $region9
    $region8: #{tpu_custom_call.1} parent=1 // pred_region
      _
    $region9: #{tpu_custom_call.1} parent=1 // pred_fallthru
      _
    // Predicated region
    $region10: #{tpu_custom_call.1} parent=1 // pred_check
      _
    $region11: #{tpu_custom_call.1} parent=1 // pred_check_branch
      %16 = sbr.rel (0) target = $region13
    $region12: #{tpu_custom_call.1} parent=1 // pred_region
      _
    $region13: #{tpu_custom_call.1} parent=1 // pred_fallthru
      _
    // Predicated region
    $region14: #{tpu_custom_call.1} parent=1 // pred_check
      _
    $region15: #{tpu_custom_call.1} parent=1 // pred_check_branch
      %18 = sbr.rel (0) target = $region17
    $region16: #{tpu_custom_call.1} parent=1 // pred_region
      _
    $region17: #{tpu_custom_call.1} parent=1 // pred_fallthru
      _
    // Predicated region
    $region18: #{tpu_custom_call.1} parent=1 // pred_check
      _
    $region19: #{tpu_custom_call.1} parent=1 // pred_check_branch
      %20 = sbr.rel (0) target = $region21
    $region20: #{tpu_custom_call.1} parent=1 // pred_region
      _
    $region21: #{tpu_custom_call.1} parent=1 // pred_fallthru
      _
    %v21 = vld [vmem:[%s1] sm:$0xff]
    %v22 = vld [vmem:[%s1 + $0x8] sm:$0xff]
    %v23 = vld [vmem:[%s0] sm:$0xff]
    %v24 = vld [vmem:[%s0 + $0x8] sm:$0xff]
    %v25 = vld [vmem:[%s0 + $0x10] sm:$0xff]
    %v26 = vld [vmem:[%s0 + $0x18] sm:$0xff]
    %v27 = vld [vmem:[%s0 + $0x20] sm:$0xff]
    %v28 = vld [vmem:[%s0 + $0x28] sm:$0xff]
    %v29 = vld [vmem:[%s0 + $0x30] sm:$0xff]
    %v30 = vld [vmem:[%s0 + $0x38] sm:$0xff]
    %v31 = vld [vmem:[%s0 + $0x40] sm:$0xff]
    %v32 = vld [vmem:[%s0 + $0x48] sm:$0xff]
    %v33 = vld [vmem:[%s0 + $0x50] sm:$0xff]
    %v34 = vld [vmem:[%s0 + $0x58] sm:$0xff]
    %v35 = vld [vmem:[%s0 + $0x60] sm:$0xff]
    %v36 = vld [vmem:[%s0 + $0x68] sm:$0xff]
    %v37 = vld [vmem:[%s0 + $0x70] sm:$0xff]
    %v38 = vld [vmem:[%s0 + $0x78] sm:$0xff]
    %39 = vmatprep.subr.mxu0 0.0
    %40 = vmatpush1.msra.mxu0 %v38
    %41 = vmatprep.subr.mxu0 0.0
    %42 = vmatpush1.msra.mxu0 %v37
    %43 = vmatprep.subr.mxu0 0.0
    %44 = vmatpush1.msra.mxu0 %v36
    %45 = vmatprep.subr.mxu0 0.0
    %46 = vmatpush1.msra.mxu0 %v35
    %47 = vmatprep.subr.mxu0 0.0
    %48 = vmatpush1.msra.mxu0 %v34
    %49 = vmatprep.subr.mxu0 0.0
    %50 = vmatpush1.msra.mxu0 %v33
    %51 = vmatprep.subr.mxu0 0.0
    %52 = vmatpush1.msra.mxu0 %v32
    %53 = vmatprep.subr.mxu0 0.0
    %54 = vmatpush1.msra.mxu0 %v31
    %55 = vmatprep.subr.mxu0 0.0
    %56 = vmatpush1.msra.mxu0 %v30
    %57 = vmatprep.subr.mxu0 0.0
    %58 = vmatpush1.msra.mxu0 %v29
    %59 = vmatprep.subr.mxu0 0.0
    %60 = vmatpush1.msra.mxu0 %v28
    %61 = vmatprep.subr.mxu0 0.0
    %62 = vmatpush1.msra.mxu0 %v27
    %63 = vmatprep.subr.mxu0 0.0
    %64 = vmatpush1.msra.mxu0 %v26
    %65 = vmatprep.subr.mxu0 0.0
    %66 = vmatpush1.msra.mxu0 %v25
    %67 = vmatprep.subr.mxu0 0.0
    %68 = vmatpush1.msra.mxu0 %v24
    %69 = vmatprep.subr.mxu0 0.0
    %70 = vmatpush1.msra.mxu0 %v23
    %71 = vmatprep.subr.mxu0 0.0
    %72 = vmatpush2.msra.mxu0 0.0
    %73 = vmatprep.subr.mxu0 0.0
    %74 = vmatpush2.msra.mxu0 0.0
    %75 = vmatprep.subr.mxu0 0.0
    %76 = vmatpush2.msra.mxu0 0.0
    %77 = vmatprep.subr.mxu0 0.0
    %78 = vmatpush2.msra.mxu0 0.0
    %79 = vmatprep.subr.mxu0 0.0
    %80 = vmatpush2.msra.mxu0 0.0
    %81 = vmatprep.subr.mxu0 0.0
    %82 = vmatpush2.msra.mxu0 0.0
    %83 = vmatprep.subr.mxu0 0.0
    %84 = vmatpush2.msra.mxu0 0.0
    %85 = vmatprep.subr.mxu0 0.0
    %86 = vmatpush2.msra.mxu0 0.0
    %87 = vmatprep.subr.mxu0 0.0
    %88 = vmatpush2.msra.mxu0 0.0
    %89 = vmatprep.subr.mxu0 0.0
    %90 = vmatpush2.msra.mxu0 0.0
    %91 = vmatprep.subr.mxu0 0.0
    %92 = vmatpush2.msra.mxu0 0.0
    %93 = vmatprep.subr.mxu0 0.0
    %94 = vmatpush2.msra.mxu0 0.0
    %95 = vmatprep.subr.mxu0 0.0
    %96 = vmatpush2.msra.mxu0 0.0
    %97 = vmatprep.subr.mxu0 0.0
    %98 = vmatpush2.msra.mxu0 0.0
    %99 = vmatprep.subr.mxu0 0.0
    %100 = vmatpush2.msra.mxu0 0.0
    %101 = vmatprep.subr.mxu0 0.0
    %102 = vmatpush2.msra.mxu0 0.0
    %103 = vmatprep.mubr.f32.mxu0 0.0
    %104 = vmatmul.mubr.f32.gmra.mxu0 %v21
    %v105 = vpop.f32.mrf.mxu0
    %v106 = vadd.f32 0.0, %v105
    %v107 = vpop.f32.mrf.mxu0
    %108 = vmatprep.mubr.f32.mxu0 0.0
    %109 = vmatmul.mubr.f32.gmra.mxu0 %v22
    %v110 = vpop.f32.mrf.mxu0
    %v111 = vadd.f32 0.0, %v110
    %v112 = vpop.f32.mrf.mxu0
    %113 = vdwg.mxu0
    %v114 = vlaneseq
    %v115 = vshrl.u32 %v114, 7
    %v116 = vadd.s32 %v115, 8
    %v117 = vld [vmem:[%s2] sm:$0x1]
    %v118 = vlaneseq
    %v119 = vshrl.u32 %v118, 7
    %v120 = vsub.s32 0, %v119
    %v121 = vrot.slane %v117, %v120
    %vm122 = vcmp.eq.s32.totalorder %v115, %v121
    %vm123 = vcmp.eq.s32.totalorder %v116, %v121
    %v124 = vsel %vm122, 1, 0
    %v125 = vsel %vm123, 1, 0
    %v126 = vcvt.s32.f32 %v124
    %v127 = vcvt.s32.f32 %v125
    %v128 = vld [vmem:[%s3] sm:$0x1]
    %v129 = vlaneseq
    %v130 = vshrl.u32 %v129, 7
    %v131 = vsub.s32 0, %v130
    %v132 = vrot.slane %v128, %v131
    %vm133 = vcmp.eq.s32.totalorder %v115, %v132
    %vm134 = vcmp.eq.s32.totalorder %v116, %v132
    %v135 = vsel %vm133, 1, 0
    %v136 = vsel %vm134, 1, 0
    %v137 = vcvt.s32.f32 %v135
    %v138 = vcvt.s32.f32 %v136
    %v139 = vmul.f32 %v106, %v126
    %v140 = vmul.f32 %v111, %v127
    %vm141 = vcmask 64512
    %v142 = vsel %vm141, %v139, 0.0
    %v143 = vsel %vm141, %v140, 0.0
    %v144 = vadd.f32 %v142, %v143
    %v145 = vrot.slane %v144, 4
    %v146 = vadd.f32 %v144, %v145
    %v147 = vrot.slane %v146, 2
    %v148 = vadd.f32 %v146, %v147
    %v149 = vrot.slane %v148, 1
    %v150 = vadd.f32 %v148, %v149
    %v151 = vmul.f32 %v106, %v137
    %v152 = vmul.f32 %v111, %v138
    %v153 = vsel %vm141, %v151, 0.0
    %v154 = vsel %vm141, %v152, 0.0
    %v155 = vadd.f32 %v153, %v154
    %v156 = vrot.slane %v155, 4
    %v157 = vadd.f32 %v155, %v156
    %v158 = vrot.slane %v157, 2
    %v159 = vadd.f32 %v157, %v158
    %v160 = vrot.slane %v159, 1
    %v161 = vadd.f32 %v159, %v160
    %vm162 = vcmp.ne.f32.partialorder %v150, 0.0
    %v163 = vsel %vm162, %v161, 1.0
    %v164 = vlog2.pop %v163
    %v165 = vmul.f32 %v164, 0.6931472
    %v166 = vsel %vm162, %v150, 1.0
    %v167 = vlog2.pop %v166
    %v168 = vmul.f32 %v167, 0.6931472
    %v169 = vsub.f32 %v165, %v168
    %v170 = vsel %vm162, %v169, 0.0
    %v171 = vld [vmem:[%s4] sm:$0x1]
    %v172 = vmul.f32 %v171, %v170
    %v173 = vadd.f32 %v172, 0.0
    %v174 = vld [vmem:[%s2 + $0x1] sm:$0x1]
    %v175 = vlaneseq
    %v176 = vshrl.u32 %v175, 7
    %v177 = vsub.s32 0, %v176
    %v178 = vrot.slane %v174, %v177
    %vm179 = vcmp.eq.s32.totalorder %v115, %v178
    %vm180 = vcmp.eq.s32.totalorder %v116, %v178
    %v181 = vsel %vm179, 1, 0
    %v182 = vsel %vm180, 1, 0
    %v183 = vcvt.s32.f32 %v181
    %v184 = vcvt.s32.f32 %v182
    %v185 = vld [vmem:[%s3 + $0x1] sm:$0x1]
    %v186 = vlaneseq
    %v187 = vshrl.u32 %v186, 7
    %v188 = vsub.s32 0, %v187
    %v189 = vrot.slane %v185, %v188
    %vm190 = vcmp.eq.s32.totalorder %v115, %v189
    %vm191 = vcmp.eq.s32.totalorder %v116, %v189
    %v192 = vsel %vm190, 1, 0
    %v193 = vsel %vm191, 1, 0
    %v194 = vcvt.s32.f32 %v192
    %v195 = vcvt.s32.f32 %v193
    %v196 = vmul.f32 %v106, %v183
    %v197 = vmul.f32 %v111, %v184
    %v198 = vsel %vm141, %v196, 0.0
    %v199 = vsel %vm141, %v197, 0.0
    %v200 = vadd.f32 %v198, %v199
    %v201 = vrot.slane %v200, 4
    %v202 = vadd.f32 %v200, %v201
    %v203 = vrot.slane %v202, 2
    %v204 = vadd.f32 %v202, %v203
    %v205 = vrot.slane %v204, 1
    %v206 = vadd.f32 %v204, %v205
    %v207 = vmul.f32 %v106, %v194
    %v208 = vmul.f32 %v111, %v195
    %v209 = vsel %vm141, %v207, 0.0
    %v210 = vsel %vm141, %v208, 0.0
    %v211 = vadd.f32 %v209, %v210
    %v212 = vrot.slane %v211, 4
    %v213 = vadd.f32 %v211, %v212
    %v214 = vrot.slane %v213, 2
    %v215 = vadd.f32 %v213, %v214
    %v216 = vrot.slane %v215, 1
    %v217 = vadd.f32 %v215, %v216
    %vm218 = vcmp.ne.f32.partialorder %v206, 0.0
    %v219 = vsel %vm218, %v217, 1.0
    %v220 = vlog2.pop %v219
    %v221 = vmul.f32 %v220, 0.6931472
    %v222 = vsel %vm218, %v206, 1.0
    %v223 = vlog2.pop %v222
    %v224 = vmul.f32 %v223, 0.6931472
    %v225 = vsub.f32 %v221, %v224
    %v226 = vsel %vm218, %v225, 0.0
    %v227 = vld [vmem:[%s4 + $0x1] sm:$0x1]
    %v228 = vmul.f32 %v227, %v226
    %v229 = vadd.f32 %v173, %v228
    %v230 = vld [vmem:[%s2 + $0x2] sm:$0x1]
    %v231 = vlaneseq
    %v232 = vshrl.u32 %v231, 7
    %v233 = vsub.s32 0, %v232
    %v234 = vrot.slane %v230, %v233
    %vm235 = vcmp.eq.s32.totalorder %v115, %v234
    %vm236 = vcmp.eq.s32.totalorder %v116, %v234
    %v237 = vsel %vm235, 1, 0
    %v238 = vsel %vm236, 1, 0
    %v239 = vcvt.s32.f32 %v237
    %v240 = vcvt.s32.f32 %v238
    %v241 = vld [vmem:[%s3 + $0x2] sm:$0x1]
    %v242 = vlaneseq
    %v243 = vshrl.u32 %v242, 7
    %v244 = vsub.s32 0, %v243
    %v245 = vrot.slane %v241, %v244
    %vm246 = vcmp.eq.s32.totalorder %v115, %v245
    %vm247 = vcmp.eq.s32.totalorder %v116, %v245
    %v248 = vsel %vm246, 1, 0
    %v249 = vsel %vm247, 1, 0
    %v250 = vcvt.s32.f32 %v248
    %v251 = vcvt.s32.f32 %v249
    %v252 = vmul.f32 %v106, %v239
    %v253 = vmul.f32 %v111, %v240
    %v254 = vsel %vm141, %v252, 0.0
    %v255 = vsel %vm141, %v253, 0.0
    %v256 = vadd.f32 %v254, %v255
    %v257 = vrot.slane %v256, 4
    %v258 = vadd.f32 %v256, %v257
    %v259 = vrot.slane %v258, 2
    %v260 = vadd.f32 %v258, %v259
    %v261 = vrot.slane %v260, 1
    %v262 = vadd.f32 %v260, %v261
    %v263 = vmul.f32 %v106, %v250
    %v264 = vmul.f32 %v111, %v251
    %v265 = vsel %vm141, %v263, 0.0
    %v266 = vsel %vm141, %v264, 0.0
    %v267 = vadd.f32 %v265, %v266
    %v268 = vrot.slane %v267, 4
    %v269 = vadd.f32 %v267, %v268
    %v270 = vrot.slane %v269, 2
    %v271 = vadd.f32 %v269, %v270
    %v272 = vrot.slane %v271, 1
    %v273 = vadd.f32 %v271, %v272
    %vm274 = vcmp.ne.f32.partialorder %v262, 0.0
    %v275 = vsel %vm274, %v273, 1.0
    %v276 = vlog2.pop %v275
    %v277 = vmul.f32 %v276, 0.6931472
    %v278 = vsel %vm274, %v262, 1.0
    %v279 = vlog2.pop %v278
    %v280 = vmul.f32 %v279, 0.6931472
    %v281 = vsub.f32 %v277, %v280
    %v282 = vsel %vm274, %v281, 0.0
    %v283 = vld [vmem:[%s4 + $0x2] sm:$0x1]
    %v284 = vmul.f32 %v283, %v282
    %v285 = vadd.f32 %v229, %v284
    %vm286 = vcmask 57344
    %287 = vst.msk [vmem:[#allocation2] sm:$0x1] %vm286, %v285
    // Predicated region
    $region22: #{tpu_custom_call.1} parent=1 // pred_check
      _
    $region23: #{tpu_custom_call.1} parent=1 // pred_check_branch
      %289 = sbr.rel (0) target = $region25
    $region24: #{tpu_custom_call.1} parent=1 // pred_region
      %s291 = ssub.s32 16, 16
      %292 = vsyncadd [#allocation3], %s291
      %s294 = sshll.u32 [#allocation2], 4
      %s295 = int_to_ptr.vmem [resolvable:$true] %s294
      %297 = dma.vmem_to_hbm [thread:$0]  %s295, 16, %s5, [#allocation3]
    $region25: #{tpu_custom_call.1} parent=1 // pred_fallthru
      _
    // Predicated region
    $region26: #{tpu_custom_call.1} parent=1 // pred_check
      _
    $region27: #{tpu_custom_call.1} parent=1 // pred_check_branch
      %299 = sbr.rel (0) target = $region29
    $region28: #{tpu_custom_call.1} parent=1 // pred_region
      %300 = dma.done [#allocation3], 16
    $region29: #{tpu_custom_call.1} parent=1 // pred_fallthru
      _
    %301 = vsyncpa [#allocation3], 1

</llo_original>
